<compile_context>
chip_gen: v5e
topology: v5e:2x2
jax: 0.10.0
libtpu: 0.0.40
codegen_flags: <defaults>
</compile_context>

<pallas_src>
import numpy as np
import jax
import jax.numpy as jnp
from jax.experimental import pallas as pl
from jax.experimental.pallas import tpu as pltpu

TB_MAX = 1024  # max batch tile (sublane-aligned); sweep 512-2048 if desired


def _round_up(x, m):
    return ((x + m - 1) // m) * m


# ----------------------------------------------------------------------------
# Host-side SO(3) machinery (replaces e3nn SO3.clebsch_gordan / normalizeRs).
# Real CG tensors are computed deterministically: trivial/identity cases are
# handled in closed form (matching the identity assertion in the PyTorch
# module), generic cases as the 1-dim null space of the infinitesimal
# equivariance constraint in the real spherical-harmonic basis.
# ----------------------------------------------------------------------------
def _su2_generators(l):
    m = np.arange(-l, l + 1)
    Jz = np.diag(m).astype(np.complex128)
    d = 2 * l + 1
    Jp = np.zeros((d, d), dtype=np.complex128)
    for i in range(d - 1):
        mm = m[i]
        Jp[i + 1, i] = np.sqrt(l * (l + 1) - mm * (mm + 1))
    Jm = Jp.conj().T
    Jx = (Jp + Jm) / 2.0
    Jy = (Jp - Jm) / 2.0j
    return Jx, Jy, Jz


def _complex_to_real_Q(l):
    d = 2 * l + 1
    Q = np.zeros((d, d), dtype=np.complex128)
    s = 1.0 / np.sqrt(2.0)
    Q[l, l] = 1.0
    for m in range(1, l + 1):
        Q[l + m, l - m] = s
        Q[l + m, l + m] = s * (-1.0) ** m
        Q[l - m, l - m] = 1j * s
        Q[l - m, l + m] = -1j * s * (-1.0) ** m
    return Q


def _real_generators(l):
    Q = _complex_to_real_Q(l)
    gens = []
    for J in _su2_generators(l):
        K = Q @ (-1j * J) @ Q.conj().T
        assert np.abs(K.imag).max() < 1e-10
        gens.append(np.ascontiguousarray(K.real))
    return gens


def real_clebsch_gordan(l, l1, l2):
    """Real CG tensor C[i, j, k] with Frobenius norm 1 (e3nn normalization)."""
    d, d1, d2 = 2 * l + 1, 2 * l1 + 1, 2 * l2 + 1
    # Selection rule: zero tensor outside |l1-l2| <= l <= l1+l2.
    if not (abs(l1 - l2) <= l <= l1 + l2):
        return np.zeros((d, d1, d2))
    # Closed-form cases (l1 == 0 or l2 == 0): C * sqrt(2l+1) == identity,
    # exactly the invariant the PyTorch __init__ asserts.  These also avoid
    # the SVD null-space path, which degenerates for tiny constraint matrices
    # (e.g. (0,0,0) -> the previous IndexError).
    if l1 == 0 and l2 == 0:
        return np.ones((1, 1, 1))
    if l2 == 0:
        return (np.eye(d) / np.sqrt(d)).reshape(d, d1, 1)
    if l1 == 0:
        return (np.eye(d) / np.sqrt(d)).reshape(d, 1, d2)
    # Generic case: 1-dim null space of the equivariance constraint.
    A, A1, A2 = _real_generators(l), _real_generators(l1), _real_generators(l2)
    I, I1, I2 = np.eye(d), np.eye(d1), np.eye(d2)
    blocks = []
    for k in range(3):
        M = (np.kron(np.kron(A[k], I1), I2)
             + np.kron(np.kron(I, A1[k]), I2)
             + np.kron(np.kron(I, I1), A2[k]))
        blocks.append(M)
    M = np.concatenate(blocks, axis=0)
    _, S, Vh = np.linalg.svd(M)
    assert S.size >= 2 and S[-1] < 1e-8 and S[-2] > 1e-4, \
        "expected 1-dimensional null space"
    C = Vh[-1].reshape(d, d1, d2)
    flat = C.ravel()
    idx = int(np.argmax(np.abs(flat)))
    if flat[idx] < 0:
        C = -C
    return C


def _default_get_ls(l1, l2):
    return list(range(abs(l1 - l2), l1 + l2 + 1))


def normalize_Rs(Rs):
    out = []
    for r in Rs:
        if len(r) == 2:
            mul, l = r
            p = 0
        else:
            mul, l, p = r
        if mul == 0:
            continue
        if out and out[-1][1] == l and out[-1][2] == p:
            out[-1] = (out[-1][0] + mul, l, p)
        else:
            out.append((mul, l, p))
    return out


# ----------------------------------------------------------------------------
# Pallas kernel.
# Per batch tile:
#   rep1[z, a*n2+b] = f1[z, a]     (via 0/1 expansion matrix E1, on the MXU)
#   rep2[z, a*n2+b] = f2[z, b]     (via 0/1 expansion matrix E2, on the MXU)
#   out            = (rep1 * rep2) @ W2            (single MXU push, K=n1*n2)
# No in-kernel reshapes, lane slices, or serialized accumulator chains.
# ----------------------------------------------------------------------------
def _mult_kernel(f1_ref, f2_ref, e1_ref, e2_ref, w_ref, o_ref):
    hp = jax.lax.Precision.HIGHEST
    f1 = f1_ref[...]                                           # (TB, n1)
    f2 = f2_ref[...]                                           # (TB, n2)
    rep1 = jnp.dot(f1, e1_ref[...],
                   preferred_element_type=jnp.float32, precision=hp)
    rep2 = jnp.dot(f2, e2_ref[...],
                   preferred_element_type=jnp.float32, precision=hp)
    outer = rep1 * rep2                                        # (TB, n1*n2)
    o_ref[...] = jnp.dot(outer, w_ref[...],
                         preferred_element_type=jnp.float32,
                         precision=hp).astype(o_ref.dtype)


class Multiplication:
    def __init__(self, Rs_1, Rs_2, get_l_output=None):
        self.get_ls = get_l_output if get_l_output is not None else _default_get_ls
        self.Rs_1 = normalize_Rs(Rs_1)
        self.Rs_2 = normalize_Rs(Rs_2)
        self.cg = {}
        Rs_out = []
        for mul_1, l_1, p_1 in self.Rs_1:
            for mul_2, l_2, p_2 in self.Rs_2:
                for l in self.get_ls(l_1, l_2):
                    Rs_out.append((mul_1 * mul_2, l, p_1 * p_2))
                    if (l, l_1, l_2) not in self.cg:
                        self.cg[(l, l_1, l_2)] = real_clebsch_gordan(l, l_1, l_2)
        self.Rs_out = normalize_Rs(Rs_out)
        self.n_1 = sum(m * (2 * l + 1) for m, l, _ in self.Rs_1)
        self.n_2 = sum(m * (2 * l + 1) for m, l, _ in self.Rs_2)
        self.n_out = sum(m * (2 * l + 1) for m, l, _ in Rs_out)

        W = self._build_mixing_tensor()                         # (n1, n2, n_out)
        self.W2 = jnp.asarray(
            W.reshape(self.n_1 * self.n_2, self.n_out), dtype=jnp.float32)
        # 0/1 expansion matrices building the outer product on the MXU:
        #   E1[a, a*n2 + b] = 1   (repeat pattern),  E2[b, a*n2 + b] = 1 (tile)
        self.E1 = jnp.asarray(
            np.repeat(np.eye(self.n_1), self.n_2, axis=1), dtype=jnp.float32)
        self.E2 = jnp.asarray(
            np.tile(np.eye(self.n_2), (1, self.n_1)), dtype=jnp.float32)

    def _build_mixing_tensor(self):
        W = np.zeros((self.n_1, self.n_2, self.n_out), dtype=np.float64)
        o = 0
        i1 = 0
        for mul_1, l_1, _ in self.Rs_1:
            d1 = 2 * l_1 + 1
            i2 = 0
            for mul_2, l_2, _ in self.Rs_2:
                d2 = 2 * l_2 + 1
                for l in self.get_ls(l_1, l_2):
                    dl = 2 * l + 1
                    C = self.cg[(l, l_1, l_2)] * np.sqrt(dl)    # (dl, d1, d2)
                    for u in range(mul_1):
                        for v in range(mul_2):
                            for i in range(dl):
                                col = o + (u * mul_2 + v) * dl + i
                                W[i1 + u * d1:i1 + (u + 1) * d1,
                                  i2 + v * d2:i2 + (v + 1) * d2, col] = C[i]
                    o += mul_1 * mul_2 * dl
                i2 += mul_2 * d2
            i1 += mul_1 * d1
        assert o == self.n_out
        return W

    def __call__(self, features_1, features_2):
        size_1 = features_1.shape[:-1]
        size_2 = features_2.shape[:-1]
        assert size_1 == size_2
        assert features_1.shape[-1] == self.n_1
        assert features_2.shape[-1] == self.n_2
        batch = int(np.prod(size_1)) if size_1 else 1
        f1 = features_1.reshape(batch, self.n_1)
        f2 = features_2.reshape(batch, self.n_2)

        # Large sublane-aligned batch tile; no host-side padding (Pallas handles
        # the ragged last tile).  Keep >= 2 grid steps when there is enough work
        # so both v7x TensorCores can be used (dimension_semantics="parallel").
        tb = min(TB_MAX, _round_up(batch, 8))
        if batch > 8 and pl.cdiv(batch, tb) < 2:
            tb = _round_up(pl.cdiv(batch, 2), 8)
        grid = (pl.cdiv(batch, tb),)

        n12 = self.n_1 * self.n_2
        out = pl.pallas_call(
            _mult_kernel,
            out_shape=jax.ShapeDtypeStruct((batch, self.n_out), features_1.dtype),
            grid_spec=pltpu.PrefetchScalarGridSpec(
                num_scalar_prefetch=0,
                grid=grid,
                in_specs=[
                    pl.BlockSpec((tb, self.n_1), lambda i: (i, 0)),
                    pl.BlockSpec((tb, self.n_2), lambda i: (i, 0)),
                    pl.BlockSpec((self.n_1, n12), lambda i: (0, 0)),
                    pl.BlockSpec((self.n_2, n12), lambda i: (0, 0)),
                    pl.BlockSpec((n12, self.n_out), lambda i: (0, 0)),
                ],
                out_specs=pl.BlockSpec((tb, self.n_out), lambda i: (i, 0)),
            ),
            compiler_params=pltpu.CompilerParams(
                dimension_semantics=("parallel",)),
        )(f1, f2, self.E1, self.E2, self.W2)
        return out.reshape(*size_1, self.n_out)


# ----------------------------------------------------------------------------
# Pure-numpy reference replicating the PyTorch forward loop exactly.
# ----------------------------------------------------------------------------
def _reference_forward(f1, f2, mod):
    size = f1.shape[:-1]
    batch = int(np.prod(size)) if size else 1
    f1 = f1.reshape(batch, -1).astype(np.float64)
    f2 = f2.reshape(batch, -1).astype(np.float64)
    outs = []
    i1 = 0
    for mul_1, l_1, _ in mod.Rs_1:
        d1 = 2 * l_1 + 1
        b1 = f1[:, i1:i1 + mul_1 * d1].reshape(batch, mul_1, d1)
        i1 += mul_1 * d1
        i2 = 0
        for mul_2, l_2, _ in mod.Rs_2:
            d2 = 2 * l_2 + 1
            b2 = f2[:, i2:i2 + mul_2 * d2].reshape(batch, mul_2, d2)
            i2 += mul_2 * d2
            for l in mod.get_ls(l_1, l_2):
                C = mod.cg[(l, l_1, l_2)] * np.sqrt(2 * l + 1)
                o = np.einsum('ijk,zuj,zvk->zuvi', C, b1, b2).reshape(batch, -1)
                outs.append(o)
    return np.concatenate(outs, axis=1).reshape(*size, -1).astype(np.float32)


if __name__ == "__main__":
    # Example from the module docstring:
    # [(2, 0), (1, 1)] x [(1, 1), (2, 0)] -> [(2, 1), (5, 0), (1, 1), (1, 2), (2, 1)]
    Rs_1 = [(2, 0), (1, 1)]
    Rs_2 = [(1, 1), (2, 0)]
    mod = Multiplication(Rs_1, Rs_2)   # n_1 = 5, n_2 = 5, n_out = 25

    key = jax.random.PRNGKey(0)
    k1, k2 = jax.random.split(key)
    features_1 = jax.random.normal(k1, (2, 16, mod.n_1), dtype=jnp.float32)
    features_2 = jax.random.normal(k2, (2, 16, mod.n_2), dtype=jnp.float32)

    out = mod(features_1, features_2)
    out = jax.block_until_ready(out)

    ref = _reference_forward(np.asarray(features_1), np.asarray(features_2), mod)
    assert out.shape == ref.shape == (2, 16, mod.n_out)
    assert np.allclose(np.asarray(out), ref, atol=1e-4, rtol=1e-4)
    print("KERNEL_OK")
</pallas_src>

<mosaic_0001>
module attributes {stable_mosaic.version = 11 : i64} {
  func.func @_mult_kernel(%arg0: i32, %arg1: memref<16x5xf32, #tpu.memory_space<vmem>>, %arg2: memref<16x5xf32, #tpu.memory_space<vmem>>, %arg3: memref<5x25xf32, #tpu.memory_space<vmem>>, %arg4: memref<5x25xf32, #tpu.memory_space<vmem>>, %arg5: memref<25x25xf32, #tpu.memory_space<vmem>>, %arg6: memref<16x25xf32, #tpu.memory_space<vmem>>) attributes {dimension_semantics = [#tpu.dimension_semantics<parallel>], iteration_bounds = array<i64: 2>, scalar_prefetch = 0 : i64, scratch_operands = 0 : i64, tpu.core_type = #tpu.core_type<tc>, window_params = [{transform_indices = @transform_0, window_bounds = array<i64: 16, 5>}, {transform_indices = @transform_1, window_bounds = array<i64: 16, 5>}, {pipeline_mode = #tpu.pipeline_mode<synchronous>, transform_indices = @transform_2, window_bounds = array<i64: 5, 25>}, {pipeline_mode = #tpu.pipeline_mode<synchronous>, transform_indices = @transform_3, window_bounds = array<i64: 5, 25>}, {pipeline_mode = #tpu.pipeline_mode<synchronous>, transform_indices = @transform_4, window_bounds = array<i64: 25, 25>}, {transform_indices = @transform_5, window_bounds = array<i64: 16, 25>}]} {
    %c0 = arith.constant 0 : index
    %c0_0 = arith.constant 0 : index
    %0 = vector.load %arg1[%c0, %c0_0] : memref<16x5xf32, #tpu.memory_space<vmem>>, vector<16x5xf32>
    %c0_1 = arith.constant 0 : index
    %c0_2 = arith.constant 0 : index
    %1 = vector.load %arg2[%c0_1, %c0_2] : memref<16x5xf32, #tpu.memory_space<vmem>>, vector<16x5xf32>
    %c0_3 = arith.constant 0 : index
    %c0_4 = arith.constant 0 : index
    %2 = vector.load %arg3[%c0_3, %c0_4] : memref<5x25xf32, #tpu.memory_space<vmem>>, vector<5x25xf32>
    %cst = arith.constant dense<0.000000e+00> : vector<16x25xf32>
    %3 = tpu.matmul %0, %2, %cst {dimension_numbers = #tpu.dot_dimension_numbers<[1], [0], [0], [1], [0, 0, 1, 1], [], []>, precision = #tpu.contract_precision<fp32>} : vector<16x5xf32>, vector<5x25xf32>, vector<16x25xf32> -> vector<16x25xf32>
    %c0_5 = arith.constant 0 : index
    %c0_6 = arith.constant 0 : index
    %4 = vector.load %arg4[%c0_5, %c0_6] : memref<5x25xf32, #tpu.memory_space<vmem>>, vector<5x25xf32>
    %cst_7 = arith.constant dense<0.000000e+00> : vector<16x25xf32>
    %5 = tpu.matmul %1, %4, %cst_7 {dimension_numbers = #tpu.dot_dimension_numbers<[1], [0], [0], [1], [0, 0, 1, 1], [], []>, precision = #tpu.contract_precision<fp32>} : vector<16x5xf32>, vector<5x25xf32>, vector<16x25xf32> -> vector<16x25xf32>
    %6 = arith.mulf %3, %5 : vector<16x25xf32>
    %c0_8 = arith.constant 0 : index
    %c0_9 = arith.constant 0 : index
    %7 = vector.load %arg5[%c0_8, %c0_9] : memref<25x25xf32, #tpu.memory_space<vmem>>, vector<25x25xf32>
    %cst_10 = arith.constant dense<0.000000e+00> : vector<16x25xf32>
    %8 = tpu.matmul %6, %7, %cst_10 {dimension_numbers = #tpu.dot_dimension_numbers<[1], [0], [0], [1], [0, 0, 1, 1], [], []>, precision = #tpu.contract_precision<fp32>} : vector<16x25xf32>, vector<25x25xf32>, vector<16x25xf32> -> vector<16x25xf32>
    %c0_11 = arith.constant 0 : index
    %c0_12 = arith.constant 0 : index
    %9 = vector.load %arg6[%c0_11, %c0_12] : memref<16x25xf32, #tpu.memory_space<vmem>>, vector<16x25xf32>
    tpu.vector_store %arg6[%c0_11, %c0_12], %8 {strides = array<i32>} : memref<16x25xf32, #tpu.memory_space<vmem>>, vector<16x25xf32>,
    return
  }
  func.func @transform_0(%arg0: i32) -> (i32, i32) {
    %c0_i32 = arith.constant 0 : i32
    %c0_i32_0 = arith.constant 0 : i32
    return %arg0, %c0_i32 : i32, i32
  }
  func.func @transform_1(%arg0: i32) -> (i32, i32) {
    %c0_i32 = arith.constant 0 : i32
    %c0_i32_0 = arith.constant 0 : i32
    return %arg0, %c0_i32 : i32, i32
  }
  func.func @transform_2(%arg0: i32) -> (i32, i32) {
    %c0_i32 = arith.constant 0 : i32
    %c0_i32_0 = arith.constant 0 : i32
    %c0_i32_1 = arith.constant 0 : i32
    return %c0_i32, %c0_i32_0 : i32, i32
  }
  func.func @transform_3(%arg0: i32) -> (i32, i32) {
    %c0_i32 = arith.constant 0 : i32
    %c0_i32_0 = arith.constant 0 : i32
    %c0_i32_1 = arith.constant 0 : i32
    return %c0_i32, %c0_i32_0 : i32, i32
  }
  func.func @transform_4(%arg0: i32) -> (i32, i32) {
    %c0_i32 = arith.constant 0 : i32
    %c0_i32_0 = arith.constant 0 : i32
    %c0_i32_1 = arith.constant 0 : i32
    return %c0_i32, %c0_i32_0 : i32, i32
  }
  func.func @transform_5(%arg0: i32) -> (i32, i32) {
    %c0_i32 = arith.constant 0 : i32
    %c0_i32_0 = arith.constant 0 : i32
    return %arg0, %c0_i32 : i32, i32
  }
}

</mosaic_0001>

<llo_original>
// kernel: tpu_custom_call.1
$region0: #{tpu_custom_call.1}
  #allocation0 [shape = 'u32[]', space=smem, size = 0x4, offset = 0x4, fixed_abs, tag = 'smem constant byte address 0x4 - core index']
  #allocation1 [shape = 'u32[72,128]{1,0:T(1,128)}', space=vmem, size = 0x9000, scoped, tag = 'internal scratch']
  %s0 = inlined_call_operand.vmem [shape: f32[32,5], index: 0, kind: input, shape index: {}]
  %s1 = inlined_call_operand.vmem [shape: f32[32,5], index: 1, kind: input, shape index: {}]
  %s2 = inlined_call_operand.vmem [shape: f32[5,25], index: 2, kind: input, shape index: {}]
  %s3 = inlined_call_operand.vmem [shape: f32[5,25], index: 3, kind: input, shape index: {}]
  %s4 = inlined_call_operand.vmem [shape: f32[25,25], index: 4, kind: input, shape index: {}]
  %s5 = inlined_call_operand.hbm [shape: f32[32,25], index: 5, kind: output, shape index: {}]
  %s6 = sld [smem:[#allocation0]]
  $region53: #{tpu_custom_call.1} parent=0
    _
  %s8 = ssub.s32 1, %s6
  %s9 = scalar_select 0, %s8, %s6
  $region1: #{tpu_custom_call.1} parent=0
    #allocation2 [shape = 'u8[16384]{0}', space=vmem, size = 0x4000, scoped, tag = 'output window, operand 0']
    #allocation3 [shape = 's32[2]{0}', space=sflag, size = 0x8, scoped, tag = 'scoped memory for tpu_custom_call.1']
    %10 = vsyncpa [#allocation3], 0
    %s11 = scalar_lea.sflag [#allocation3], 1
    %12 = vsyncpa %s11, 0
    loop: start=0, step=1, limit=4
    $region2: #{tpu_custom_call.1} parent=1 // loop_pre_header
      _
    $region3: #{tpu_custom_call.1} parent=1 // loop_header
      %s14 = sphi 0, %s18
      %p15 = scmp.ge.s32.totalorder %s14, 4
      %s24 = sphi 0, %s26
      %s27 = sphi 0, %s24
      %s28 = sphi 0, %s27
      %s44 = sphi 0, %s28
      %s50 = sphi 0, %s52
      %s53 = sphi 0, %s50
      %s54 = sphi 0, %s53
      %s70 = sphi 0, %s54
      %s74 = sphi 0, %s74
      %s76 = sphi 0, %s74
      %s77 = sphi 0, %s76
      %s91 = sphi 0, %s77
      %s95 = sphi 0, %s95
      %s97 = sphi 0, %s95
      %s98 = sphi 0, %s97
      %s112 = sphi 0, %s98
      %s116 = sphi 0, %s116
      %s118 = sphi 0, %s116
      %s119 = sphi 0, %s118
      %s133 = sphi 0, %s119
      %s139 = sphi 0, %s141
      %s142 = sphi 0, %s139
      %s143 = sphi 0, %s142
      %s159 = sphi 0, %s143
    $region4: #{tpu_custom_call.1} parent=1 // loop_header_branch
      %17 = sbr.rel (%p15) target = $region8
    $region5: #{tpu_custom_call.1} parent=1 // loop_body
      %s19 = ssub.s32 %s14, 1
      %s20 = ssub.s32 %s14, 2
      %s21 = sadd.s32 %s14, 1
      %s22 = ssub.s32 %s14, %s21
      %p23 = scmp.eq.s32.totalorder %s22, 0
      %s25 = sadd.s32 %s24, 1
      %s26 = scalar_select %p23, %s24, %s25
      %p29 = pneg %p23
      %p30 = scmp.eq.s32.totalorder %s14, 1
      %p31 = por %p29, %p30
      %p32 = scmp.ne.s32.totalorder %s24, %s27
      %p33 = scmp.eq.s32.totalorder %s14, 0
      %p34 = por %p32, %p33
      %p35 = scmp.ne.s32.totalorder %s24, %s27
      %p36 = scmp.eq.s32.totalorder %s19, 1
      %p37 = por %p35, %p36
      %p38 = scmp.ne.s32.totalorder %s27, %s28
      %p39 = scmp.eq.s32.totalorder %s19, 0
      %p40 = por %p38, %p39
      %p41 = scmp.ne.s32.totalorder %s27, %s28
      %p42 = scmp.eq.s32.totalorder %s20, 1
      %p43 = por %p41, %p42
      %p45 = scmp.ne.s32.totalorder %s28, %s44
      %p46 = scmp.eq.s32.totalorder %s20, 0
      %p47 = por %p45, %p46
      %s48 = ssub.s32 %s14, %s21
      %p49 = scmp.eq.s32.totalorder %s48, 0
      %s51 = sadd.s32 %s50, 1
      %s52 = scalar_select %p49, %s50, %s51
      %p55 = pneg %p49
      %p56 = scmp.eq.s32.totalorder %s14, 1
      %p57 = por %p55, %p56
      %p58 = scmp.ne.s32.totalorder %s50, %s53
      %p59 = scmp.eq.s32.totalorder %s14, 0
      %p60 = por %p58, %p59
      %p61 = scmp.ne.s32.totalorder %s50, %s53
      %p62 = scmp.eq.s32.totalorder %s19, 1
      %p63 = por %p61, %p62
      %p64 = scmp.ne.s32.totalorder %s53, %s54
      %p65 = scmp.eq.s32.totalorder %s19, 0
      %p66 = por %p64, %p65
      %p67 = scmp.ne.s32.totalorder %s53, %s54
      %p68 = scmp.eq.s32.totalorder %s20, 1
      %p69 = por %p67, %p68
      %p71 = scmp.ne.s32.totalorder %s54, %s70
      %p72 = scmp.eq.s32.totalorder %s20, 0
      %p73 = por %p71, %p72
      %s75 = sadd.s32 %s74, 1
      %p78 = scmp.eq.s32.totalorder %s14, 1
      %p79 = scmp.ne.s32.totalorder %s74, %s76
      %p80 = scmp.eq.s32.totalorder %s14, 0
      %p81 = por %p79, %p80
      %p82 = scmp.ne.s32.totalorder %s74, %s76
      %p83 = scmp.eq.s32.totalorder %s19, 1
      %p84 = por %p82, %p83
      %p85 = scmp.ne.s32.totalorder %s76, %s77
      %p86 = scmp.eq.s32.totalorder %s19, 0
      %p87 = por %p85, %p86
      %p88 = scmp.ne.s32.totalorder %s76, %s77
      %p89 = scmp.eq.s32.totalorder %s20, 1
      %p90 = por %p88, %p89
      %p92 = scmp.ne.s32.totalorder %s77, %s91
      %p93 = scmp.eq.s32.totalorder %s20, 0
      %p94 = por %p92, %p93
      %s96 = sadd.s32 %s95, 1
      %p99 = scmp.eq.s32.totalorder %s14, 1
      %p100 = scmp.ne.s32.totalorder %s95, %s97
      %p101 = scmp.eq.s32.totalorder %s14, 0
      %p102 = por %p100, %p101
      %p103 = scmp.ne.s32.totalorder %s95, %s97
      %p104 = scmp.eq.s32.totalorder %s19, 1
      %p105 = por %p103, %p104
      %p106 = scmp.ne.s32.totalorder %s97, %s98
      %p107 = scmp.eq.s32.totalorder %s19, 0
      %p108 = por %p106, %p107
      %p109 = scmp.ne.s32.totalorder %s97, %s98
      %p110 = scmp.eq.s32.totalorder %s20, 1
      %p111 = por %p109, %p110
      %p113 = scmp.ne.s32.totalorder %s98, %s112
      %p114 = scmp.eq.s32.totalorder %s20, 0
      %p115 = por %p113, %p114
      %s117 = sadd.s32 %s116, 1
      %p120 = scmp.eq.s32.totalorder %s14, 1
      %p121 = scmp.ne.s32.totalorder %s116, %s118
      %p122 = scmp.eq.s32.totalorder %s14, 0
      %p123 = por %p121, %p122
      %p124 = scmp.ne.s32.totalorder %s116, %s118
      %p125 = scmp.eq.s32.totalorder %s19, 1
      %p126 = por %p124, %p125
      %p127 = scmp.ne.s32.totalorder %s118, %s119
      %p128 = scmp.eq.s32.totalorder %s19, 0
      %p129 = por %p127, %p128
      %p130 = scmp.ne.s32.totalorder %s118, %s119
      %p131 = scmp.eq.s32.totalorder %s20, 1
      %p132 = por %p130, %p131
      %p134 = scmp.ne.s32.totalorder %s119, %s133
      %p135 = scmp.eq.s32.totalorder %s20, 0
      %p136 = por %p134, %p135
      %s137 = ssub.s32 %s14, %s21
      %p138 = scmp.eq.s32.totalorder %s137, 0
      %s140 = sadd.s32 %s139, 1
      %s141 = scalar_select %p138, %s139, %s140
      %p144 = pneg %p138
      %p145 = scmp.eq.s32.totalorder %s14, 1
      %p146 = por %p144, %p145
      %p147 = scmp.ne.s32.totalorder %s139, %s142
      %p148 = scmp.eq.s32.totalorder %s14, 0
      %p149 = por %p147, %p148
      %p150 = scmp.ne.s32.totalorder %s139, %s142
      %p151 = scmp.eq.s32.totalorder %s19, 1
      %p152 = por %p150, %p151
      %p153 = scmp.ne.s32.totalorder %s142, %s143
      %p154 = scmp.eq.s32.totalorder %s19, 0
      %p155 = por %p153, %p154
      %p156 = scmp.ne.s32.totalorder %s142, %s143
      %p157 = scmp.eq.s32.totalorder %s20, 1
      %p158 = por %p156, %p157
      %p160 = scmp.ne.s32.totalorder %s143, %s159
      %p161 = scmp.eq.s32.totalorder %s20, 0
      %p162 = por %p160, %p161
      %p163 = scmp.le.s32.totalorder 1, %s14
      %p164 = scmp.lt.s32.totalorder %s14, 3
      %p165 = pnand %p163, %p164
      %p166 = pneg %p165
      // Predicated region
      $region9: #{tpu_custom_call.1} parent=5 // pred_check
        _
      $region10: #{tpu_custom_call.1} parent=5 // pred_check_branch
        %168 = sbr.rel (%p165) target = $region12
      $region11: #{tpu_custom_call.1} parent=5 // pred_region
        %s169 = ssub.s32 %s14, 1
        // Predicated region
        $region13: #{tpu_custom_call.1} parent=11 // pred_check
          %p170 = pneg %p87
        $region14: #{tpu_custom_call.1} parent=11 // pred_check_branch
          %172 = sbr.rel (%p170) target = $region16
        $region15: #{tpu_custom_call.1} parent=11 // pred_region
          _
        $region16: #{tpu_custom_call.1} parent=11 // pred_fallthru
          _
        // Predicated region
        $region17: #{tpu_custom_call.1} parent=11 // pred_check
          %p173 = pneg %p108
        $region18: #{tpu_custom_call.1} parent=11 // pred_check_branch
          %175 = sbr.rel (%p173) target = $region20
        $region19: #{tpu_custom_call.1} parent=11 // pred_region
          _
        $region20: #{tpu_custom_call.1} parent=11 // pred_fallthru
          _
        // Predicated region
        $region21: #{tpu_custom_call.1} parent=11 // pred_check
          %p176 = pneg %p129
        $region22: #{tpu_custom_call.1} parent=11 // pred_check_branch
          %178 = sbr.rel (%p176) target = $region24
        $region23: #{tpu_custom_call.1} parent=11 // pred_region
          _
        $region24: #{tpu_custom_call.1} parent=11 // pred_fallthru
          _
      $region12: #{tpu_custom_call.1} parent=5 // pred_fallthru
        _
      %p179 = scmp.lt.s32.totalorder %s14, 2
      // Predicated region
      $region25: #{tpu_custom_call.1} parent=5 // pred_check
        %p180 = pneg %p179
      $region26: #{tpu_custom_call.1} parent=5 // pred_check_branch
        %182 = sbr.rel (%p180) target = $region28
      $region27: #{tpu_custom_call.1} parent=5 // pred_region
        // Predicated region
        $region29: #{tpu_custom_call.1} parent=27 // pred_check
          %p183 = pneg %p34
        $region30: #{tpu_custom_call.1} parent=27 // pred_check_branch
          %185 = sbr.rel (%p183) target = $region32
        $region31: #{tpu_custom_call.1} parent=27 // pred_region
          %s186 = smul.u32 2, %s14
          %p187 = scmp.lt.s32.totalorder %s186, 3
          %s188 = scalar_select %p187, %s186, 3
          %s189 = smul.addr %s188, 8
          %s190 = scalar_lea.vmem %s0, %s189
          %s191 = smul.u32 2, %s14
        $region32: #{tpu_custom_call.1} parent=27 // pred_fallthru
          _
        // Predicated region
        $region33: #{tpu_custom_call.1} parent=27 // pred_check
          %p192 = pneg %p60
        $region34: #{tpu_custom_call.1} parent=27 // pred_check_branch
          %194 = sbr.rel (%p192) target = $region36
        $region35: #{tpu_custom_call.1} parent=27 // pred_region
          %s195 = smul.u32 2, %s14
          %p196 = scmp.lt.s32.totalorder %s195, 3
          %s197 = scalar_select %p196, %s195, 3
          %s198 = smul.addr %s197, 8
          %s199 = scalar_lea.vmem %s1, %s198
          %s200 = smul.u32 2, %s14
        $region36: #{tpu_custom_call.1} parent=27 // pred_fallthru
          _
      $region28: #{tpu_custom_call.1} parent=5 // pred_fallthru
        _
      %p201 = scmp.le.s32.totalorder 1, %s14
      %p202 = scmp.lt.s32.totalorder %s14, 3
      %p203 = pnand %p201, %p202
      %p204 = pneg %p203
      // Predicated region
      $region37: #{tpu_custom_call.1} parent=5 // pred_check
        _
      $region38: #{tpu_custom_call.1} parent=5 // pred_check_branch
        %206 = sbr.rel (%p203) target = $region40
      $region39: #{tpu_custom_call.1} parent=5 // pred_region
        %s207 = ssub.s32 %s14, 1
        %s208 = smul.u32 2, %s19
        %p209 = scmp.lt.s32.totalorder %s208, 3
        %s210 = scalar_select %p209, %s208, 3
        %s211 = smul.addr %s210, 8
        %s212 = scalar_lea.vmem %s0, %s211
        %p213 = pneg %p40
        %p214 = pneg %p37
        %s215 = smul.u32 2, %s19
        %p216 = scmp.lt.s32.totalorder %s215, 3
        %s217 = scalar_select %p216, %s215, 3
        %s218 = smul.addr %s217, 8
        %s219 = scalar_lea.vmem %s1, %s218
        %p220 = pneg %p66
        %p221 = pneg %p63
        %p222 = pneg %p87
        %p223 = pneg %p84
        %p224 = pneg %p108
        %p225 = pneg %p105
        %p226 = pneg %p129
        %p227 = pneg %p126
        %p228 = pneg %p155
        %p229 = pneg %p152
        %s230 = sand.u32 %s142, 1
        %s231 = scalar_lea.sflag [#allocation3], %s230
        %s232 = sand.u32 %s142, 1
        %s233 = smul.addr %s232, 16
        %s234 = scalar_lea.vmem [#allocation2], %s233
        %s235 = smul.u32 2, %s19
        %p236 = scmp.lt.s32.totalorder %s235, 3
        %s237 = scalar_select %p236, %s235, 3
        %s238 = smul.addr %s237, 8
        %s239 = scalar_lea.vmem %s0, %s238
        %s240 = smul.u32 2, %s19
        %s241 = smul.u32 2, %s19
        %p242 = scmp.lt.s32.totalorder %s241, 3
        %s243 = scalar_select %p242, %s241, 3
        %s244 = smul.addr %s243, 8
        %s245 = scalar_lea.vmem %s1, %s244
        %s246 = smul.u32 2, %s19
        %s247 = smul.u32 2, %s19
        %v248 = vld [vmem:[%s239] sm:$0xff]
        %v249 = vld [vmem:[%s239 + $0x8] sm:$0xff]
        %v250 = vld [vmem:[%s245] sm:$0xff]
        %v251 = vld [vmem:[%s245 + $0x8] sm:$0xff]
        %v252 = vld [vmem:[%s2] sm:$0x1f]
        %vm253 = vcmask 39936
        %v255 = vsel %vm253, %v248, 0
        %v258 = vsel %vm253, %v249, 0
        %vm260 = vcmask 1044480
        %v262 = vsel %vm260, %v252, 0
        %264 = vmatpush.msra.mxu0 0.0
        %265 = vmatpush.msra.mxu0 0.0
        %266 = vmatpush.msra.mxu0 0.0
        %267 = vmatpush.msra.mxu0 0.0
        %268 = vmatpush.msra.mxu0 0.0
        %269 = vmatpush.msra.mxu0 0.0
        %270 = vmatpush.msra.mxu0 0.0
        %271 = vmatpush.msra.mxu0 0.0
        %272 = vmatpush.msra.mxu0 0.0
        %273 = vmatpush.msra.mxu0 0.0
        %274 = vmatpush.msra.mxu0 0.0
        %275 = vmatpush.msra.mxu0 0.0
        %276 = vmatpush.msra.mxu0 0.0
        %277 = vmatpush.msra.mxu0 0.0
        %278 = vmatpush.msra.mxu0 0.0
        %v279 = vand.u32 %v262, 4294901760
        %280 = vmatpush.msra.mxu0 %v279
        %v281 = vand.u32 %v255, 4294901760
        %v282 = vsub.f32 %v255, %v281
        %v283 = vand.u32 %v282, 4294901760
        %v284 = vsub.f32 %v282, %v283
        %v285 = vand.u32 %v284, 4294901760
        %286 = vmatmul.f32.gmra.mxu0 %v285
        %v287 = vpop.f32.mrf.mxu0
        %v288 = vadd.f32 0.0, %v287
        %v289 = vand.u32 %v258, 4294901760
        %v290 = vsub.f32 %v258, %v289
        %v291 = vand.u32 %v290, 4294901760
        %v292 = vsub.f32 %v290, %v291
        %v293 = vand.u32 %v292, 4294901760
        %294 = vmatmul.f32.gmra.mxu0 %v293
        %v295 = vpop.f32.mrf.mxu0
        %v296 = vadd.f32 0.0, %v295
        %297 = vdwg.mxu0
        %298 = vmatpush.msra.mxu0 0.0
        %299 = vmatpush.msra.mxu0 0.0
        %300 = vmatpush.msra.mxu0 0.0
        %301 = vmatpush.msra.mxu0 0.0
        %302 = vmatpush.msra.mxu0 0.0
        %303 = vmatpush.msra.mxu0 0.0
        %304 = vmatpush.msra.mxu0 0.0
        %305 = vmatpush.msra.mxu0 0.0
        %306 = vmatpush.msra.mxu0 0.0
        %307 = vmatpush.msra.mxu0 0.0
        %308 = vmatpush.msra.mxu0 0.0
        %309 = vmatpush.msra.mxu0 0.0
        %310 = vmatpush.msra.mxu0 0.0
        %311 = vmatpush.msra.mxu0 0.0
        %312 = vmatpush.msra.mxu0 0.0
        %v313 = vand.u32 %v262, 4294901760
        %v314 = vsub.f32 %v262, %v313
        %v315 = vand.u32 %v314, 4294901760
        %v316 = vsub.f32 %v314, %v315
        %v317 = vand.u32 %v316, 4294901760
        %318 = vmatpush.msra.mxu0 %v317
        %v319 = vand.u32 %v255, 4294901760
        %320 = vmatmul.f32.gmra.mxu0 %v319
        %v321 = vpop.f32.mrf.mxu0
        %v322 = vadd.f32 %v288, %v321
        %v323 = vand.u32 %v258, 4294901760
        %324 = vmatmul.f32.gmra.mxu0 %v323
        %v325 = vpop.f32.mrf.mxu0
        %v326 = vadd.f32 %v296, %v325
        %327 = vdwg.mxu0
        %328 = vmatpush.msra.mxu0 0.0
        %329 = vmatpush.msra.mxu0 0.0
        %330 = vmatpush.msra.mxu0 0.0
        %331 = vmatpush.msra.mxu0 0.0
        %332 = vmatpush.msra.mxu0 0.0
        %333 = vmatpush.msra.mxu0 0.0
        %334 = vmatpush.msra.mxu0 0.0
        %335 = vmatpush.msra.mxu0 0.0
        %336 = vmatpush.msra.mxu0 0.0
        %337 = vmatpush.msra.mxu0 0.0
        %338 = vmatpush.msra.mxu0 0.0
        %339 = vmatpush.msra.mxu0 0.0
        %340 = vmatpush.msra.mxu0 0.0
        %341 = vmatpush.msra.mxu0 0.0
        %342 = vmatpush.msra.mxu0 0.0
        %v343 = vand.u32 %v262, 4294901760
        %v344 = vsub.f32 %v262, %v343
        %345 = vmatpush.msra.mxu0 %v344
        %v346 = vand.u32 %v255, 4294901760
        %v347 = vsub.f32 %v255, %v346
        %348 = vmatmul.f32.gmra.mxu0 %v347
        %v349 = vpop.f32.mrf.mxu0
        %v350 = vadd.f32 %v322, %v349
        %v351 = vand.u32 %v258, 4294901760
        %v352 = vsub.f32 %v258, %v351
        %353 = vmatmul.f32.gmra.mxu0 %v352
        %v354 = vpop.f32.mrf.mxu0
        %v355 = vadd.f32 %v326, %v354
        %356 = vdwg.mxu0
        %357 = vmatpush.msra.mxu0 0.0
        %358 = vmatpush.msra.mxu0 0.0
        %359 = vmatpush.msra.mxu0 0.0
        %360 = vmatpush.msra.mxu0 0.0
        %361 = vmatpush.msra.mxu0 0.0
        %362 = vmatpush.msra.mxu0 0.0
        %363 = vmatpush.msra.mxu0 0.0
        %364 = vmatpush.msra.mxu0 0.0
        %365 = vmatpush.msra.mxu0 0.0
        %366 = vmatpush.msra.mxu0 0.0
        %367 = vmatpush.msra.mxu0 0.0
        %368 = vmatpush.msra.mxu0 0.0
        %369 = vmatpush.msra.mxu0 0.0
        %370 = vmatpush.msra.mxu0 0.0
        %371 = vmatpush.msra.mxu0 0.0
        %v372 = vand.u32 %v262, 4294901760
        %373 = vmatpush.msra.mxu0 %v372
        %v374 = vand.u32 %v255, 4294901760
        %v375 = vsub.f32 %v255, %v374
        %v376 = vand.u32 %v375, 4294901760
        %377 = vmatmul.f32.gmra.mxu0 %v376
        %v378 = vpop.f32.mrf.mxu0
        %v379 = vadd.f32 %v350, %v378
        %v380 = vand.u32 %v258, 4294901760
        %v381 = vsub.f32 %v258, %v380
        %v382 = vand.u32 %v381, 4294901760
        %383 = vmatmul.f32.gmra.mxu0 %v382
        %v384 = vpop.f32.mrf.mxu0
        %v385 = vadd.f32 %v355, %v384
        %386 = vdwg.mxu0
        %387 = vmatpush.msra.mxu0 0.0
        %388 = vmatpush.msra.mxu0 0.0
        %389 = vmatpush.msra.mxu0 0.0
        %390 = vmatpush.msra.mxu0 0.0
        %391 = vmatpush.msra.mxu0 0.0
        %392 = vmatpush.msra.mxu0 0.0
        %393 = vmatpush.msra.mxu0 0.0
        %394 = vmatpush.msra.mxu0 0.0
        %395 = vmatpush.msra.mxu0 0.0
        %396 = vmatpush.msra.mxu0 0.0
        %397 = vmatpush.msra.mxu0 0.0
        %398 = vmatpush.msra.mxu0 0.0
        %399 = vmatpush.msra.mxu0 0.0
        %400 = vmatpush.msra.mxu0 0.0
        %401 = vmatpush.msra.mxu0 0.0
        %v402 = vand.u32 %v262, 4294901760
        %v403 = vsub.f32 %v262, %v402
        %v404 = vand.u32 %v403, 4294901760
        %405 = vmatpush.msra.mxu0 %v404
        %v406 = vand.u32 %v255, 4294901760
        %407 = vmatmul.f32.gmra.mxu0 %v406
        %v408 = vpop.f32.mrf.mxu0
        %v409 = vadd.f32 %v379, %v408
        %v410 = vand.u32 %v258, 4294901760
        %411 = vmatmul.f32.gmra.mxu0 %v410
        %v412 = vpop.f32.mrf.mxu0
        %v413 = vadd.f32 %v385, %v412
        %414 = vdwg.mxu0
        %415 = vmatpush.msra.mxu0 0.0
        %416 = vmatpush.msra.mxu0 0.0
        %417 = vmatpush.msra.mxu0 0.0
        %418 = vmatpush.msra.mxu0 0.0
        %419 = vmatpush.msra.mxu0 0.0
        %420 = vmatpush.msra.mxu0 0.0
        %421 = vmatpush.msra.mxu0 0.0
        %422 = vmatpush.msra.mxu0 0.0
        %423 = vmatpush.msra.mxu0 0.0
        %424 = vmatpush.msra.mxu0 0.0
        %425 = vmatpush.msra.mxu0 0.0
        %426 = vmatpush.msra.mxu0 0.0
        %427 = vmatpush.msra.mxu0 0.0
        %428 = vmatpush.msra.mxu0 0.0
        %429 = vmatpush.msra.mxu0 0.0
        %v430 = vand.u32 %v262, 4294901760
        %431 = vmatpush.msra.mxu0 %v430
        %v432 = vand.u32 %v255, 4294901760
        %433 = vmatmul.f32.gmra.mxu0 %v432
        %v434 = vpop.f32.mrf.mxu0
        %v435 = vadd.f32 %v409, %v434
        %v436 = vand.u32 %v258, 4294901760
        %437 = vmatmul.f32.gmra.mxu0 %v436
        %v438 = vpop.f32.mrf.mxu0
        %v439 = vadd.f32 %v413, %v438
        %440 = vdwg.mxu0
        %v441 = vld [vmem:[%s3] sm:$0x1f]
        %v443 = vsel %vm253, %v250, 0
        %v446 = vsel %vm253, %v251, 0
        %v449 = vsel %vm260, %v441, 0
        %451 = vmatpush.msra.mxu0 0.0
        %452 = vmatpush.msra.mxu0 0.0
        %453 = vmatpush.msra.mxu0 0.0
        %454 = vmatpush.msra.mxu0 0.0
        %455 = vmatpush.msra.mxu0 0.0
        %456 = vmatpush.msra.mxu0 0.0
        %457 = vmatpush.msra.mxu0 0.0
        %458 = vmatpush.msra.mxu0 0.0
        %459 = vmatpush.msra.mxu0 0.0
        %460 = vmatpush.msra.mxu0 0.0
        %461 = vmatpush.msra.mxu0 0.0
        %462 = vmatpush.msra.mxu0 0.0
        %463 = vmatpush.msra.mxu0 0.0
        %464 = vmatpush.msra.mxu0 0.0
        %465 = vmatpush.msra.mxu0 0.0
        %v466 = vand.u32 %v449, 4294901760
        %467 = vmatpush.msra.mxu0 %v466
        %v468 = vand.u32 %v443, 4294901760
        %v469 = vsub.f32 %v443, %v468
        %v470 = vand.u32 %v469, 4294901760
        %v471 = vsub.f32 %v469, %v470
        %v472 = vand.u32 %v471, 4294901760
        %473 = vmatmul.f32.gmra.mxu0 %v472
        %v474 = vpop.f32.mrf.mxu0
        %v475 = vadd.f32 0.0, %v474
        %v476 = vand.u32 %v446, 4294901760
        %v477 = vsub.f32 %v446, %v476
        %v478 = vand.u32 %v477, 4294901760
        %v479 = vsub.f32 %v477, %v478
        %v480 = vand.u32 %v479, 4294901760
        %481 = vmatmul.f32.gmra.mxu0 %v480
        %v482 = vpop.f32.mrf.mxu0
        %v483 = vadd.f32 0.0, %v482
        %484 = vdwg.mxu0
        %485 = vmatpush.msra.mxu0 0.0
        %486 = vmatpush.msra.mxu0 0.0
        %487 = vmatpush.msra.mxu0 0.0
        %488 = vmatpush.msra.mxu0 0.0
        %489 = vmatpush.msra.mxu0 0.0
        %490 = vmatpush.msra.mxu0 0.0
        %491 = vmatpush.msra.mxu0 0.0
        %492 = vmatpush.msra.mxu0 0.0
        %493 = vmatpush.msra.mxu0 0.0
        %494 = vmatpush.msra.mxu0 0.0
        %495 = vmatpush.msra.mxu0 0.0
        %496 = vmatpush.msra.mxu0 0.0
        %497 = vmatpush.msra.mxu0 0.0
        %498 = vmatpush.msra.mxu0 0.0
        %499 = vmatpush.msra.mxu0 0.0
        %v500 = vand.u32 %v449, 4294901760
        %v501 = vsub.f32 %v449, %v500
        %v502 = vand.u32 %v501, 4294901760
        %v503 = vsub.f32 %v501, %v502
        %v504 = vand.u32 %v503, 4294901760
        %505 = vmatpush.msra.mxu0 %v504
        %v506 = vand.u32 %v443, 4294901760
        %507 = vmatmul.f32.gmra.mxu0 %v506
        %v508 = vpop.f32.mrf.mxu0
        %v509 = vadd.f32 %v475, %v508
        %v510 = vand.u32 %v446, 4294901760
        %511 = vmatmul.f32.gmra.mxu0 %v510
        %v512 = vpop.f32.mrf.mxu0
        %v513 = vadd.f32 %v483, %v512
        %514 = vdwg.mxu0
        %515 = vmatpush.msra.mxu0 0.0
        %516 = vmatpush.msra.mxu0 0.0
        %517 = vmatpush.msra.mxu0 0.0
        %518 = vmatpush.msra.mxu0 0.0
        %519 = vmatpush.msra.mxu0 0.0
        %520 = vmatpush.msra.mxu0 0.0
        %521 = vmatpush.msra.mxu0 0.0
        %522 = vmatpush.msra.mxu0 0.0
        %523 = vmatpush.msra.mxu0 0.0
        %524 = vmatpush.msra.mxu0 0.0
        %525 = vmatpush.msra.mxu0 0.0
        %526 = vmatpush.msra.mxu0 0.0
        %527 = vmatpush.msra.mxu0 0.0
        %528 = vmatpush.msra.mxu0 0.0
        %529 = vmatpush.msra.mxu0 0.0
        %v530 = vand.u32 %v449, 4294901760
        %v531 = vsub.f32 %v449, %v530
        %532 = vmatpush.msra.mxu0 %v531
        %v533 = vand.u32 %v443, 4294901760
        %v534 = vsub.f32 %v443, %v533
        %535 = vmatmul.f32.gmra.mxu0 %v534
        %v536 = vpop.f32.mrf.mxu0
        %v537 = vadd.f32 %v509, %v536
        %v538 = vand.u32 %v446, 4294901760
        %v539 = vsub.f32 %v446, %v538
        %540 = vmatmul.f32.gmra.mxu0 %v539
        %v541 = vpop.f32.mrf.mxu0
        %v542 = vadd.f32 %v513, %v541
        %543 = vdwg.mxu0
        %544 = vmatpush.msra.mxu0 0.0
        %545 = vmatpush.msra.mxu0 0.0
        %546 = vmatpush.msra.mxu0 0.0
        %547 = vmatpush.msra.mxu0 0.0
        %548 = vmatpush.msra.mxu0 0.0
        %549 = vmatpush.msra.mxu0 0.0
        %550 = vmatpush.msra.mxu0 0.0
        %551 = vmatpush.msra.mxu0 0.0
        %552 = vmatpush.msra.mxu0 0.0
        %553 = vmatpush.msra.mxu0 0.0
        %554 = vmatpush.msra.mxu0 0.0
        %555 = vmatpush.msra.mxu0 0.0
        %556 = vmatpush.msra.mxu0 0.0
        %557 = vmatpush.msra.mxu0 0.0
        %558 = vmatpush.msra.mxu0 0.0
        %v559 = vand.u32 %v449, 4294901760
        %560 = vmatpush.msra.mxu0 %v559
        %v561 = vand.u32 %v443, 4294901760
        %v562 = vsub.f32 %v443, %v561
        %v563 = vand.u32 %v562, 4294901760
        %564 = vmatmul.f32.gmra.mxu0 %v563
        %v565 = vpop.f32.mrf.mxu0
        %v566 = vadd.f32 %v537, %v565
        %v567 = vand.u32 %v446, 4294901760
        %v568 = vsub.f32 %v446, %v567
        %v569 = vand.u32 %v568, 4294901760
        %570 = vmatmul.f32.gmra.mxu0 %v569
        %v571 = vpop.f32.mrf.mxu0
        %v572 = vadd.f32 %v542, %v571
        %573 = vdwg.mxu0
        %574 = vmatpush.msra.mxu0 0.0
        %575 = vmatpush.msra.mxu0 0.0
        %576 = vmatpush.msra.mxu0 0.0
        %577 = vmatpush.msra.mxu0 0.0
        %578 = vmatpush.msra.mxu0 0.0
        %579 = vmatpush.msra.mxu0 0.0
        %580 = vmatpush.msra.mxu0 0.0
        %581 = vmatpush.msra.mxu0 0.0
        %582 = vmatpush.msra.mxu0 0.0
        %583 = vmatpush.msra.mxu0 0.0
        %584 = vmatpush.msra.mxu0 0.0
        %585 = vmatpush.msra.mxu0 0.0
        %586 = vmatpush.msra.mxu0 0.0
        %587 = vmatpush.msra.mxu0 0.0
        %588 = vmatpush.msra.mxu0 0.0
        %v589 = vand.u32 %v449, 4294901760
        %v590 = vsub.f32 %v449, %v589
        %v591 = vand.u32 %v590, 4294901760
        %592 = vmatpush.msra.mxu0 %v591
        %v593 = vand.u32 %v443, 4294901760
        %594 = vmatmul.f32.gmra.mxu0 %v593
        %v595 = vpop.f32.mrf.mxu0
        %v596 = vadd.f32 %v566, %v595
        %v597 = vand.u32 %v446, 4294901760
        %598 = vmatmul.f32.gmra.mxu0 %v597
        %v599 = vpop.f32.mrf.mxu0
        %v600 = vadd.f32 %v572, %v599
        %601 = vdwg.mxu0
        %602 = vmatpush.msra.mxu0 0.0
        %603 = vmatpush.msra.mxu0 0.0
        %604 = vmatpush.msra.mxu0 0.0
        %605 = vmatpush.msra.mxu0 0.0
        %606 = vmatpush.msra.mxu0 0.0
        %607 = vmatpush.msra.mxu0 0.0
        %608 = vmatpush.msra.mxu0 0.0
        %609 = vmatpush.msra.mxu0 0.0
        %610 = vmatpush.msra.mxu0 0.0
        %611 = vmatpush.msra.mxu0 0.0
        %612 = vmatpush.msra.mxu0 0.0
        %613 = vmatpush.msra.mxu0 0.0
        %614 = vmatpush.msra.mxu0 0.0
        %615 = vmatpush.msra.mxu0 0.0
        %616 = vmatpush.msra.mxu0 0.0
        %v617 = vand.u32 %v449, 4294901760
        %618 = vmatpush.msra.mxu0 %v617
        %v619 = vand.u32 %v443, 4294901760
        %620 = vmatmul.f32.gmra.mxu0 %v619
        %v621 = vpop.f32.mrf.mxu0
        %v622 = vadd.f32 %v596, %v621
        %v623 = vand.u32 %v446, 4294901760
        %624 = vmatmul.f32.gmra.mxu0 %v623
        %v625 = vpop.f32.mrf.mxu0
        %v626 = vadd.f32 %v600, %v625
        %627 = vdwg.mxu0
        %v628 = vmul.f32 %v435, %v622
        %v629 = vmul.f32 %v439, %v626
        %v630 = vld [vmem:[%s4] sm:$0xff]
        %v631 = vld [vmem:[%s4 + $0x8] sm:$0xff]
        %v632 = vld [vmem:[%s4 + $0x10] sm:$0xff]
        %v633 = vld [vmem:[%s4 + $0x18] sm:$0x1]
        %vm634 = vcmask 203776
        %v636 = vsel %vm634, %v628, 0
        %v639 = vsel %vm634, %v629, 0
        %vm641 = vcmask 1040384
        %v643 = vsel %vm641, %v633, 0
        %645 = vmatpush.msra.mxu0 0.0
        %646 = vmatpush.msra.mxu0 0.0
        %647 = vmatpush.msra.mxu0 0.0
        %648 = vmatpush.msra.mxu0 0.0
        %649 = vmatpush.msra.mxu0 0.0
        %650 = vmatpush.msra.mxu0 0.0
        %651 = vmatpush.msra.mxu0 0.0
        %652 = vmatpush.msra.mxu0 0.0
        %653 = vmatpush.msra.mxu0 0.0
        %654 = vmatpush.msra.mxu0 0.0
        %655 = vmatpush.msra.mxu0 0.0
        %656 = vmatpush.msra.mxu0 0.0
        %v657 = vand.u32 %v643, 4294901760
        %658 = vmatpush.msra.mxu0 %v657
        %v659 = vand.u32 %v632, 4294901760
        %660 = vmatpush.msra.mxu0 %v659
        %v661 = vand.u32 %v631, 4294901760
        %662 = vmatpush.msra.mxu0 %v661
        %v663 = vand.u32 %v630, 4294901760
        %664 = vmatpush.msra.mxu0 %v663
        %v665 = vand.u32 %v636, 4294901760
        %v666 = vsub.f32 %v636, %v665
        %v667 = vand.u32 %v666, 4294901760
        %v668 = vsub.f32 %v666, %v667
        %v669 = vand.u32 %v668, 4294901760
        %670 = vmatmul.f32.gmra.mxu0 %v669
        %v671 = vpop.f32.mrf.mxu0
        %v672 = vadd.f32 0.0, %v671
        %v673 = vand.u32 %v639, 4294901760
        %v674 = vsub.f32 %v639, %v673
        %v675 = vand.u32 %v674, 4294901760
        %v676 = vsub.f32 %v674, %v675
        %v677 = vand.u32 %v676, 4294901760
        %678 = vmatmul.f32.gmra.mxu0 %v677
        %v679 = vpop.f32.mrf.mxu0
        %v680 = vadd.f32 0.0, %v679
        %681 = vdwg.mxu0
        %682 = vmatpush.msra.mxu0 0.0
        %683 = vmatpush.msra.mxu0 0.0
        %684 = vmatpush.msra.mxu0 0.0
        %685 = vmatpush.msra.mxu0 0.0
        %686 = vmatpush.msra.mxu0 0.0
        %687 = vmatpush.msra.mxu0 0.0
        %688 = vmatpush.msra.mxu0 0.0
        %689 = vmatpush.msra.mxu0 0.0
        %690 = vmatpush.msra.mxu0 0.0
        %691 = vmatpush.msra.mxu0 0.0
        %692 = vmatpush.msra.mxu0 0.0
        %693 = vmatpush.msra.mxu0 0.0
        %v694 = vand.u32 %v643, 4294901760
        %v695 = vsub.f32 %v643, %v694
        %v696 = vand.u32 %v695, 4294901760
        %v697 = vsub.f32 %v695, %v696
        %v698 = vand.u32 %v697, 4294901760
        %699 = vmatpush.msra.mxu0 %v698
        %v700 = vand.u32 %v632, 4294901760
        %v701 = vsub.f32 %v632, %v700
        %v702 = vand.u32 %v701, 4294901760
        %v703 = vsub.f32 %v701, %v702
        %v704 = vand.u32 %v703, 4294901760
        %705 = vmatpush.msra.mxu0 %v704
        %v706 = vand.u32 %v631, 4294901760
        %v707 = vsub.f32 %v631, %v706
        %v708 = vand.u32 %v707, 4294901760
        %v709 = vsub.f32 %v707, %v708
        %v710 = vand.u32 %v709, 4294901760
        %711 = vmatpush.msra.mxu0 %v710
        %v712 = vand.u32 %v630, 4294901760
        %v713 = vsub.f32 %v630, %v712
        %v714 = vand.u32 %v713, 4294901760
        %v715 = vsub.f32 %v713, %v714
        %v716 = vand.u32 %v715, 4294901760
        %717 = vmatpush.msra.mxu0 %v716
        %v718 = vand.u32 %v636, 4294901760
        %719 = vmatmul.f32.gmra.mxu0 %v718
        %v720 = vpop.f32.mrf.mxu0
        %v721 = vadd.f32 %v672, %v720
        %v722 = vand.u32 %v639, 4294901760
        %723 = vmatmul.f32.gmra.mxu0 %v722
        %v724 = vpop.f32.mrf.mxu0
        %v725 = vadd.f32 %v680, %v724
        %726 = vdwg.mxu0
        %727 = vmatpush.msra.mxu0 0.0
        %728 = vmatpush.msra.mxu0 0.0
        %729 = vmatpush.msra.mxu0 0.0
        %730 = vmatpush.msra.mxu0 0.0
        %731 = vmatpush.msra.mxu0 0.0
        %732 = vmatpush.msra.mxu0 0.0
        %733 = vmatpush.msra.mxu0 0.0
        %734 = vmatpush.msra.mxu0 0.0
        %735 = vmatpush.msra.mxu0 0.0
        %736 = vmatpush.msra.mxu0 0.0
        %737 = vmatpush.msra.mxu0 0.0
        %738 = vmatpush.msra.mxu0 0.0
        %v739 = vand.u32 %v643, 4294901760
        %v740 = vsub.f32 %v643, %v739
        %741 = vmatpush.msra.mxu0 %v740
        %v742 = vand.u32 %v632, 4294901760
        %v743 = vsub.f32 %v632, %v742
        %744 = vmatpush.msra.mxu0 %v743
        %v745 = vand.u32 %v631, 4294901760
        %v746 = vsub.f32 %v631, %v745
        %747 = vmatpush.msra.mxu0 %v746
        %v748 = vand.u32 %v630, 4294901760
        %v749 = vsub.f32 %v630, %v748
        %750 = vmatpush.msra.mxu0 %v749
        %v751 = vand.u32 %v636, 4294901760
        %v752 = vsub.f32 %v636, %v751
        %753 = vmatmul.f32.gmra.mxu0 %v752
        %v754 = vpop.f32.mrf.mxu0
        %v755 = vadd.f32 %v721, %v754
        %v756 = vand.u32 %v639, 4294901760
        %v757 = vsub.f32 %v639, %v756
        %758 = vmatmul.f32.gmra.mxu0 %v757
        %v759 = vpop.f32.mrf.mxu0
        %v760 = vadd.f32 %v725, %v759
        %761 = vdwg.mxu0
        %762 = vmatpush.msra.mxu0 0.0
        %763 = vmatpush.msra.mxu0 0.0
        %764 = vmatpush.msra.mxu0 0.0
        %765 = vmatpush.msra.mxu0 0.0
        %766 = vmatpush.msra.mxu0 0.0
        %767 = vmatpush.msra.mxu0 0.0
        %768 = vmatpush.msra.mxu0 0.0
        %769 = vmatpush.msra.mxu0 0.0
        %770 = vmatpush.msra.mxu0 0.0
        %771 = vmatpush.msra.mxu0 0.0
        %772 = vmatpush.msra.mxu0 0.0
        %773 = vmatpush.msra.mxu0 0.0
        %v774 = vand.u32 %v643, 4294901760
        %775 = vmatpush.msra.mxu0 %v774
        %v776 = vand.u32 %v632, 4294901760
        %777 = vmatpush.msra.mxu0 %v776
        %v778 = vand.u32 %v631, 4294901760
        %779 = vmatpush.msra.mxu0 %v778
        %v780 = vand.u32 %v630, 4294901760
        %781 = vmatpush.msra.mxu0 %v780
        %v782 = vand.u32 %v636, 4294901760
        %v783 = vsub.f32 %v636, %v782
        %v784 = vand.u32 %v783, 4294901760
        %785 = vmatmul.f32.gmra.mxu0 %v784
        %v786 = vpop.f32.mrf.mxu0
        %v787 = vadd.f32 %v755, %v786
        %v788 = vand.u32 %v639, 4294901760
        %v789 = vsub.f32 %v639, %v788
        %v790 = vand.u32 %v789, 4294901760
        %791 = vmatmul.f32.gmra.mxu0 %v790
        %v792 = vpop.f32.mrf.mxu0
        %v793 = vadd.f32 %v760, %v792
        %794 = vdwg.mxu0
        %795 = vmatpush.msra.mxu0 0.0
        %796 = vmatpush.msra.mxu0 0.0
        %797 = vmatpush.msra.mxu0 0.0
        %798 = vmatpush.msra.mxu0 0.0
        %799 = vmatpush.msra.mxu0 0.0
        %800 = vmatpush.msra.mxu0 0.0
        %801 = vmatpush.msra.mxu0 0.0
        %802 = vmatpush.msra.mxu0 0.0
        %803 = vmatpush.msra.mxu0 0.0
        %804 = vmatpush.msra.mxu0 0.0
        %805 = vmatpush.msra.mxu0 0.0
        %806 = vmatpush.msra.mxu0 0.0
        %v807 = vand.u32 %v643, 4294901760
        %v808 = vsub.f32 %v643, %v807
        %v809 = vand.u32 %v808, 4294901760
        %810 = vmatpush.msra.mxu0 %v809
        %v811 = vand.u32 %v632, 4294901760
        %v812 = vsub.f32 %v632, %v811
        %v813 = vand.u32 %v812, 4294901760
        %814 = vmatpush.msra.mxu0 %v813
        %v815 = vand.u32 %v631, 4294901760
        %v816 = vsub.f32 %v631, %v815
        %v817 = vand.u32 %v816, 4294901760
        %818 = vmatpush.msra.mxu0 %v817
        %v819 = vand.u32 %v630, 4294901760
        %v820 = vsub.f32 %v630, %v819
        %v821 = vand.u32 %v820, 4294901760
        %822 = vmatpush.msra.mxu0 %v821
        %v823 = vand.u32 %v636, 4294901760
        %824 = vmatmul.f32.gmra.mxu0 %v823
        %v825 = vpop.f32.mrf.mxu0
        %v826 = vadd.f32 %v787, %v825
        %v827 = vand.u32 %v639, 4294901760
        %828 = vmatmul.f32.gmra.mxu0 %v827
        %v829 = vpop.f32.mrf.mxu0
        %v830 = vadd.f32 %v793, %v829
        %831 = vdwg.mxu0
        %832 = vmatpush.msra.mxu0 0.0
        %833 = vmatpush.msra.mxu0 0.0
        %834 = vmatpush.msra.mxu0 0.0
        %835 = vmatpush.msra.mxu0 0.0
        %836 = vmatpush.msra.mxu0 0.0
        %837 = vmatpush.msra.mxu0 0.0
        %838 = vmatpush.msra.mxu0 0.0
        %839 = vmatpush.msra.mxu0 0.0
        %840 = vmatpush.msra.mxu0 0.0
        %841 = vmatpush.msra.mxu0 0.0
        %842 = vmatpush.msra.mxu0 0.0
        %843 = vmatpush.msra.mxu0 0.0
        %v844 = vand.u32 %v643, 4294901760
        %845 = vmatpush.msra.mxu0 %v844
        %v846 = vand.u32 %v632, 4294901760
        %847 = vmatpush.msra.mxu0 %v846
        %v848 = vand.u32 %v631, 4294901760
        %849 = vmatpush.msra.mxu0 %v848
        %v850 = vand.u32 %v630, 4294901760
        %851 = vmatpush.msra.mxu0 %v850
        %v852 = vand.u32 %v636, 4294901760
        %853 = vmatmul.f32.gmra.mxu0 %v852
        %v854 = vpop.f32.mrf.mxu0
        %v855 = vadd.f32 %v826, %v854
        %v856 = vand.u32 %v639, 4294901760
        %857 = vmatmul.f32.gmra.mxu0 %v856
        %v858 = vpop.f32.mrf.mxu0
        %v859 = vadd.f32 %v830, %v858
        %860 = vdwg.mxu0
        %861 = vst.msk [vmem:[%s234] sm:$0xff] %vm634, %v855
        %862 = vst.msk [vmem:[%s234 + $0x8] sm:$0xff] %vm634, %v859
        %s863 = sand.u32 %s142, 1
        %s864 = scalar_lea.sflag [#allocation3], %s863
        %s865 = sand.u32 %s142, 1
        %s866 = smul.addr %s865, 16
        %s867 = scalar_lea.vmem [#allocation2], %s866
        // Predicated region
        $region41: #{tpu_custom_call.1} parent=39 // pred_check
          %p868 = pneg %p152
        $region42: #{tpu_custom_call.1} parent=39 // pred_check_branch
          %870 = sbr.rel (%p868) target = $region44
        $region43: #{tpu_custom_call.1} parent=39 // pred_region
          %s871 = smul.u32 2, %s19
          %873 = vsyncadd %s864, 0
          %s874 = smul.addr %s871, 8
          %s875 = scalar_lea.hbm %s5, %s874
          %s876 = sshll.u32 %s867, 4
          %s877 = int_to_ptr.vmem [resolvable:$true] %s876
          %s878 = sshll.u32 %s875, 4
          %s879 = int_to_ptr.hbm [resolvable:$true] %s878
          %884 = dma.vmem_to_hbm [thread:$0]  %s877, 256, %s879, %s864, 128, 128, 8
        $region44: #{tpu_custom_call.1} parent=39 // pred_fallthru
          _
      $region40: #{tpu_custom_call.1} parent=5 // pred_fallthru
        _
      %p885 = scmp.le.s32.totalorder 2, %s14
      // Predicated region
      $region45: #{tpu_custom_call.1} parent=5 // pred_check
        %p886 = pneg %p885
      $region46: #{tpu_custom_call.1} parent=5 // pred_check_branch
        %888 = sbr.rel (%p886) target = $region48
      $region47: #{tpu_custom_call.1} parent=5 // pred_region
        %s889 = ssub.s32 %s14, 2
        // Predicated region
        $region49: #{tpu_custom_call.1} parent=47 // pred_check
          %p890 = pneg %p158
        $region50: #{tpu_custom_call.1} parent=47 // pred_check_branch
          %892 = sbr.rel (%p890) target = $region52
        $region51: #{tpu_custom_call.1} parent=47 // pred_region
          %s893 = sand.u32 %s143, 1
          %s894 = scalar_lea.sflag [#allocation3], %s893
          %s895 = sand.u32 %s143, 1
          %s896 = smul.addr %s895, 16
          %s897 = scalar_lea.vmem [#allocation2], %s896
          %899 = dma.done %s894, 256
        $region52: #{tpu_custom_call.1} parent=47 // pred_fallthru
          _
      $region48: #{tpu_custom_call.1} parent=5 // pred_fallthru
        _
    $region6: #{tpu_custom_call.1} parent=1 // loop_footer
      %s18 = sadd.s32 1, %s14
    $region7: #{tpu_custom_call.1} parent=1 // loop_footer_branch
      %13 = sbr.rel target = $region3
    $region8: #{tpu_custom_call.1} parent=1 // loop_exit
      _
    %900 = vsyncpa [#allocation3], 1
    %s901 = scalar_lea.sflag [#allocation3], 1
    %902 = vsyncpa %s901, 1

</llo_original>
